<compile_context>
chip_gen: v7x
topology: tpu7x:2x2x1
jax: 0.10.0
libtpu: 0.0.40
codegen_flags: <defaults>
</compile_context>

<pallas_src>
import functools

import jax
import jax.numpy as jnp
from jax import lax
from jax.experimental import pallas as pl
from jax.experimental.pallas import tpu as pltpu

KH = KW = 3
HIDDEN = 512   # MoCoProjectionHead hidden dim
PROJ = 128     # MoCoProjectionHead output dim
LANE = 128
SUB = 8
CHUNK = 128    # conv output rows processed per MXU matmul (row-chunked epilogue)


def _round_up(n, m):
    return (n + m - 1) // m * m


# ----------------------------- backbone kernel ------------------------------
def conv_pool_kernel(x_ref, wc_ref, bc_ref, feat_ref, *, hw):
    """Per grid step: G images.  3x3 conv (single K-merged matmul per row
    chunk) -> bias -> ReLU -> global average pool.

    x_ref:    (G, HW_pad, Kp)  bf16   im2col'd rows (Kp = pad(9*Cin) to 128)
    wc_ref:   (Kp, Cout_p)     bf16   conv weight, K-major
    bc_ref:   (1, Cout_p)      f32
    feat_ref: (G, 1, Cout_p)   f32    pooled features (query_f, channel-padded)
    """
    G, hw_pad, _ = x_ref.shape
    cout = wc_ref.shape[-1]
    n_chunks = hw_pad // CHUNK
    inv_hw = 1.0 / hw

    w = wc_ref[...]              # small, VMEM-resident (constant index_map)
    b = bc_ref[...]

    for g in range(G):                           # static unroll, G is small
        acc = jnp.zeros((1, cout), jnp.float32)
        for ci in range(n_chunks):               # row-chunked: live f32 set
            base = ci * CHUNK                    # stays at ~16 vregs
            lhs = x_ref[g, pl.ds(base, CHUNK), :]                 # (CHUNK, Kp)
            y = jnp.dot(lhs, w, preferred_element_type=jnp.float32)
            y = jnp.maximum(y + b, 0.0)
            if base + CHUNK > hw:                # static: boundary chunk only
                rows = base + lax.broadcasted_iota(jnp.int32, (CHUNK, 1), 0)
                y = jnp.where(rows < hw, y, 0.0)
            acc = acc + jnp.sum(y, axis=0, keepdims=True)         # XLU reduce
        feat_ref[g] = acc * inv_hw


# ------------------------- projection head kernel ---------------------------
def projection_head_kernel(f_ref, w1_ref, b1_ref, w2_ref, b2_ref, q_ref):
    """Batched MoCoProjectionHead: Linear -> ReLU -> Linear, once per batch.
    bf16 operands (activations cast, weights streamed bf16), f32 accumulate."""
    f = f_ref[...].astype(jnp.bfloat16)                           # (B, Cout_p)
    h = jnp.dot(f, w1_ref[...], preferred_element_type=jnp.float32) + b1_ref[...]
    h = jnp.maximum(h, 0.0).astype(jnp.bfloat16)
    q = jnp.dot(h, w2_ref[...], preferred_element_type=jnp.float32) + b2_ref[...]
    q_ref[...] = q.astype(q_ref.dtype)


def init_params(key, c_in, out_feature):
    ks = jax.random.split(key, 6)
    wc = jax.random.normal(ks[0], (KH, KW, c_in, out_feature), jnp.float32) * 0.1
    bc = jax.random.normal(ks[1], (1, out_feature), jnp.float32) * 0.01
    w1 = jax.random.normal(ks[2], (out_feature, HIDDEN), jnp.float32) * 0.05
    b1 = jax.random.normal(ks[3], (1, HIDDEN), jnp.float32) * 0.01
    w2 = jax.random.normal(ks[4], (HIDDEN, PROJ), jnp.float32) * 0.05
    b2 = jax.random.normal(ks[5], (1, PROJ), jnp.float32) * 0.01
    return (wc, bc, w1, b1, w2, b2)


@jax.jit
def moco_forward(x_nchw, params):
    wc, bc, w1, b1, w2, b2 = params
    B, Cin, H, W = x_nchw.shape
    Cout = wc.shape[-1]
    HW = H * W
    K = KH * KW * Cin

    Kp = _round_up(K, LANE)           # pad contraction to the lane width
    Cout_p = _round_up(Cout, LANE)
    HW_pad = _round_up(HW, CHUNK)

    # Group G images per grid step to amortize per-step pipeline overhead,
    # but keep >= 2 grid steps so v7x's second TensorCore gets work.
    G = max(1, min(8, (B + 1) // 2))
    B_pad = _round_up(B, G)

    # ---- glue: NCHW -> NHWC, tiny im2col (HW x 9*Cin), pad, bf16 ----
    x = jnp.transpose(x_nchw, (0, 2, 3, 1))                        # NHWC
    xp = jnp.pad(x, ((0, 0), (1, 1), (1, 1), (0, 0)))
    cols = [xp[:, dy:dy + H, dx:dx + W, :]
            for dy in range(KH) for dx in range(KW)]               # [dy,dx,cin]
    xi = jnp.concatenate(cols, axis=-1).reshape(B, HW, K)
    xi = jnp.pad(xi, ((0, B_pad - B), (0, HW_pad - HW), (0, Kp - K)))
    xi = xi.astype(jnp.bfloat16)

    # conv weights: (KH,KW,Cin,Cout) -> (9*Cin, Cout), pad K & Cout, bf16
    wc2d = jnp.pad(wc.reshape(K, Cout), ((0, Kp - K), (0, Cout_p - Cout)))
    wc2d = wc2d.astype(jnp.bfloat16)
    bc_p = jnp.pad(bc, ((0, 0), (0, Cout_p - Cout)))

    conv_kern = functools.partial(conv_pool_kernel, hw=HW)
    featp = pl.pallas_call(
        conv_kern,
        out_shape=jax.ShapeDtypeStruct((B_pad, 1, Cout_p), jnp.float32),
        grid=(B_pad // G,),
        in_specs=[
            pl.BlockSpec((G, HW_pad, Kp), lambda b: (b, 0, 0)),    # images
            pl.BlockSpec((Kp, Cout_p), lambda b: (0, 0)),          # conv W
            pl.BlockSpec((1, Cout_p), lambda b: (0, 0)),           # conv b
        ],
        out_specs=pl.BlockSpec((G, 1, Cout_p), lambda b: (b, 0, 0)),
        compiler_params=pltpu.CompilerParams(
            dimension_semantics=("parallel",),
            vmem_limit_bytes=32 * 1024 * 1024),
    )(xi, wc2d, bc_p)

    feat2d = featp.reshape(B_pad, Cout_p)                          # query_f (padded)

    # ---- projection head: single batched call (full-M MXU occupancy) ----
    w1_p = jnp.pad(w1, ((0, Cout_p - Cout), (0, 0))).astype(jnp.bfloat16)
    w2_b = w2.astype(jnp.bfloat16)
    q_pad = pl.pallas_call(
        projection_head_kernel,
        out_shape=jax.ShapeDtypeStruct((B_pad, PROJ), jnp.float32),
        grid=(1,),
        in_specs=[
            pl.BlockSpec((B_pad, Cout_p), lambda i: (0, 0)),
            pl.BlockSpec((Cout_p, HIDDEN), lambda i: (0, 0)),
            pl.BlockSpec((1, HIDDEN), lambda i: (0, 0)),
            pl.BlockSpec((HIDDEN, PROJ), lambda i: (0, 0)),
            pl.BlockSpec((1, PROJ), lambda i: (0, 0)),
        ],
        out_specs=pl.BlockSpec((B_pad, PROJ), lambda i: (0, 0)),
        compiler_params=pltpu.CompilerParams(
            vmem_limit_bytes=32 * 1024 * 1024),
    )(feat2d, w1_p, b1, w2_b, b2)

    query_f = feat2d[:B, :Cout]      # drop channel/batch padding
    query = q_pad[:B, :]
    return query_f, query


def reference_forward(x_nchw, params):
    # f32 reference mirroring the kernel's precision: bf16-rounded matmul
    # operands (inputs, weights, and projection-head activations), f32 accum.
    wc, bc, w1, b1, w2, b2 = params
    r = lambda a: a.astype(jnp.bfloat16).astype(jnp.float32)
    x = jnp.transpose(x_nchw, (0, 2, 3, 1))
    y = lax.conv_general_dilated(
        r(x), r(wc), window_strides=(1, 1), padding="SAME",
        dimension_numbers=("NHWC", "HWIO", "NHWC"),
        precision=lax.Precision.HIGHEST)
    y = jnp.maximum(y + bc.reshape(1, 1, 1, -1), 0.0)
    feat = jnp.mean(y, axis=(1, 2))
    h = jnp.maximum(
        jnp.dot(r(feat), r(w1), precision=lax.Precision.HIGHEST) + b1, 0.0)
    q = jnp.dot(r(h), r(w2), precision=lax.Precision.HIGHEST) + b2
    return feat, q


if __name__ == "__main__":
    B, Cin, H, W = 2, 4, 16, 16
    out_feature = 32

    x = jax.random.normal(jax.random.PRNGKey(0), (B, Cin, H, W), jnp.float32)
    params = init_params(jax.random.PRNGKey(1), Cin, out_feature)

    query_f, query = moco_forward(x, params)
    jax.block_until_ready((query_f, query))

    ref_f, ref_q = reference_forward(x, params)
    assert query_f.shape == (B, out_feature) and query.shape == (B, PROJ)
    assert jnp.allclose(query_f, ref_f, rtol=1e-2, atol=2e-3), (
        float(jnp.max(jnp.abs(query_f - ref_f))))
    assert jnp.allclose(query, ref_q, rtol=1e-2, atol=2e-3), (
        float(jnp.max(jnp.abs(query - ref_q))))

    print("KERNEL_OK")
</pallas_src>

<mosaic_0001>
module attributes {stable_mosaic.version = 11 : i64} {
  func.func @conv_pool_kernel(%arg0: i32, %arg1: memref<1x256x128xbf16, #tpu.memory_space<vmem>>, %arg2: memref<128x128xbf16, #tpu.memory_space<vmem>>, %arg3: memref<1x128xf32, #tpu.memory_space<vmem>>, %arg4: memref<1x1x128xf32, #tpu.memory_space<vmem>>) attributes {dimension_semantics = [#tpu.dimension_semantics<parallel>], iteration_bounds = array<i64: 2>, scalar_prefetch = 0 : i64, scratch_operands = 0 : i64, tpu.core_type = #tpu.core_type<tc>, window_params = [{transform_indices = @transform_0, window_bounds = array<i64: 1, 256, 128>}, {pipeline_mode = #tpu.pipeline_mode<synchronous>, transform_indices = @transform_1, window_bounds = array<i64: 128, 128>}, {pipeline_mode = #tpu.pipeline_mode<synchronous>, transform_indices = @transform_2, window_bounds = array<i64: 1, 128>}, {transform_indices = @transform_3, window_bounds = array<i64: 1, 1, 128>}]} {
    %c0 = arith.constant 0 : index
    %c0_0 = arith.constant 0 : index
    %0 = vector.load %arg2[%c0, %c0_0] : memref<128x128xbf16, #tpu.memory_space<vmem>>, vector<128x128xbf16>
    %c0_1 = arith.constant 0 : index
    %c0_2 = arith.constant 0 : index
    %1 = vector.load %arg3[%c0_1, %c0_2] : memref<1x128xf32, #tpu.memory_space<vmem>>, vector<1x128xf32>
    %cst = arith.constant 0.000000e+00 : f32
    %2 = vector.broadcast %cst : f32 to vector<1x128xf32>
    %c0_3 = arith.constant 0 : index
    %c0_4 = arith.constant 0 : index
    %c0_5 = arith.constant 0 : index
    %3 = vector.load %arg1[%c0_3, %c0_4, %c0_5] : memref<1x256x128xbf16, #tpu.memory_space<vmem>>, vector<1x128x128xbf16>
    %4 = vector.shape_cast %3 : vector<1x128x128xbf16> to vector<128x128xbf16>
    %cst_6 = arith.constant dense<0.000000e+00> : vector<128x128xf32>
    %5 = tpu.matmul %4, %0, %cst_6 {dimension_numbers = #tpu.dot_dimension_numbers<[1], [0], [0], [1], [0, 0, 1, 1], [], []>} : vector<128x128xbf16>, vector<128x128xbf16>, vector<128x128xf32> -> vector<128x128xf32>
    %6 = vector.broadcast %1 : vector<1x128xf32> to vector<128x128xf32>
    %7 = arith.addf %5, %6 : vector<128x128xf32>
    %cst_7 = arith.constant 0.000000e+00 : f32
    %8 = vector.broadcast %cst_7 : f32 to vector<128x128xf32>
    %9 = arith.maximumf %7, %8 : vector<128x128xf32>
    %cst_8 = arith.constant dense<0.000000e+00> : vector<128xf32>
    %10 = vector.multi_reduction <add>, %9, %cst_8 [0] : vector<128x128xf32> to vector<128xf32>
    %11 = vector.shape_cast %10 : vector<128xf32> to vector<1x128xf32>
    %12 = arith.addf %2, %11 : vector<1x128xf32>
    %c0_9 = arith.constant 0 : index
    %c128 = arith.constant 128 : index
    %c0_10 = arith.constant 0 : index
    %13 = vector.load %arg1[%c0_9, %c128, %c0_10] : memref<1x256x128xbf16, #tpu.memory_space<vmem>>, vector<1x128x128xbf16>
    %14 = vector.shape_cast %13 : vector<1x128x128xbf16> to vector<128x128xbf16>
    %cst_11 = arith.constant dense<0.000000e+00> : vector<128x128xf32>
    %15 = tpu.matmul %14, %0, %cst_11 {dimension_numbers = #tpu.dot_dimension_numbers<[1], [0], [0], [1], [0, 0, 1, 1], [], []>} : vector<128x128xbf16>, vector<128x128xbf16>, vector<128x128xf32> -> vector<128x128xf32>
    %16 = vector.broadcast %1 : vector<1x128xf32> to vector<128x128xf32>
    %17 = arith.addf %15, %16 : vector<128x128xf32>
    %cst_12 = arith.constant 0.000000e+00 : f32
    %18 = vector.broadcast %cst_12 : f32 to vector<128x128xf32>
    %19 = arith.maximumf %17, %18 : vector<128x128xf32>
    %cst_13 = arith.constant dense<0.000000e+00> : vector<128xf32>
    %20 = vector.multi_reduction <add>, %19, %cst_13 [0] : vector<128x128xf32> to vector<128xf32>
    %21 = vector.shape_cast %20 : vector<128xf32> to vector<1x128xf32>
    %22 = arith.addf %12, %21 : vector<1x128xf32>
    %cst_14 = arith.constant 3.906250e-03 : f32
    %23 = vector.broadcast %cst_14 : f32 to vector<1x128xf32>
    %24 = arith.mulf %22, %23 : vector<1x128xf32>
    %c0_15 = arith.constant 0 : index
    %c0_16 = arith.constant 0 : index
    %c0_17 = arith.constant 0 : index
    %25 = vector.load %arg4[%c0_15, %c0_16, %c0_17] : memref<1x1x128xf32, #tpu.memory_space<vmem>>, vector<1x1x128xf32>
    %26 = vector.shape_cast %25 : vector<1x1x128xf32> to vector<1x128xf32>
    %27 = vector.shape_cast %24 : vector<1x128xf32> to vector<1x1x128xf32>
    tpu.vector_store %arg4[%c0_15, %c0_16, %c0_17], %27 {strides = array<i32>} : memref<1x1x128xf32, #tpu.memory_space<vmem>>, vector<1x1x128xf32>,
    return
  }
  func.func @transform_0(%arg0: i32) -> (i32, i32, i32) {
    %c0_i32 = arith.constant 0 : i32
    %c0_i32_0 = arith.constant 0 : i32
    %c0_i32_1 = arith.constant 0 : i32
    return %arg0, %c0_i32, %c0_i32_0 : i32, i32, i32
  }
  func.func @transform_1(%arg0: i32) -> (i32, i32) {
    %c0_i32 = arith.constant 0 : i32
    %c0_i32_0 = arith.constant 0 : i32
    %c0_i32_1 = arith.constant 0 : i32
    return %c0_i32, %c0_i32_0 : i32, i32
  }
  func.func @transform_2(%arg0: i32) -> (i32, i32) {
    %c0_i32 = arith.constant 0 : i32
    %c0_i32_0 = arith.constant 0 : i32
    %c0_i32_1 = arith.constant 0 : i32
    return %c0_i32, %c0_i32_0 : i32, i32
  }
  func.func @transform_3(%arg0: i32) -> (i32, i32, i32) {
    %c0_i32 = arith.constant 0 : i32
    %c0_i32_0 = arith.constant 0 : i32
    %c0_i32_1 = arith.constant 0 : i32
    return %arg0, %c0_i32, %c0_i32_0 : i32, i32, i32
  }
}

module attributes {stable_mosaic.version = 11 : i64} {
  func.func @projection_head_kernel(%arg0: i32, %arg1: memref<2x128xf32, #tpu.memory_space<vmem>>, %arg2: memref<128x512xbf16, #tpu.memory_space<vmem>>, %arg3: memref<1x512xf32, #tpu.memory_space<vmem>>, %arg4: memref<512x128xbf16, #tpu.memory_space<vmem>>, %arg5: memref<1x128xf32, #tpu.memory_space<vmem>>, %arg6: memref<2x128xf32, #tpu.memory_space<vmem>>) attributes {dimension_semantics = [#tpu.dimension_semantics<arbitrary>], iteration_bounds = array<i64: 1>, scalar_prefetch = 0 : i64, scratch_operands = 0 : i64, tpu.core_type = #tpu.core_type<tc>, window_params = [{pipeline_mode = #tpu.pipeline_mode<synchronous>, transform_indices = @transform_0, window_bounds = array<i64: 2, 128>}, {pipeline_mode = #tpu.pipeline_mode<synchronous>, transform_indices = @transform_1, window_bounds = array<i64: 128, 512>}, {pipeline_mode = #tpu.pipeline_mode<synchronous>, transform_indices = @transform_2, window_bounds = array<i64: 1, 512>}, {pipeline_mode = #tpu.pipeline_mode<synchronous>, transform_indices = @transform_3, window_bounds = array<i64: 512, 128>}, {pipeline_mode = #tpu.pipeline_mode<synchronous>, transform_indices = @transform_4, window_bounds = array<i64: 1, 128>}, {pipeline_mode = #tpu.pipeline_mode<synchronous>, transform_indices = @transform_5, window_bounds = array<i64: 2, 128>}]} {
    %c0 = arith.constant 0 : index
    %c0_0 = arith.constant 0 : index
    %0 = vector.load %arg1[%c0, %c0_0] : memref<2x128xf32, #tpu.memory_space<vmem>>, vector<2x128xf32>
    %1 = arith.truncf %0 : vector<2x128xf32> to vector<2x128xbf16>
    %c0_1 = arith.constant 0 : index
    %c0_2 = arith.constant 0 : index
    %2 = vector.load %arg2[%c0_1, %c0_2] : memref<128x512xbf16, #tpu.memory_space<vmem>>, vector<128x512xbf16>
    %cst = arith.constant dense<0.000000e+00> : vector<2x512xf32>
    %3 = tpu.matmul %1, %2, %cst {dimension_numbers = #tpu.dot_dimension_numbers<[1], [0], [0], [1], [0, 0, 1, 1], [], []>} : vector<2x128xbf16>, vector<128x512xbf16>, vector<2x512xf32> -> vector<2x512xf32>
    %c0_3 = arith.constant 0 : index
    %c0_4 = arith.constant 0 : index
    %4 = vector.load %arg3[%c0_3, %c0_4] : memref<1x512xf32, #tpu.memory_space<vmem>>, vector<1x512xf32>
    %5 = vector.broadcast %4 : vector<1x512xf32> to vector<2x512xf32>
    %6 = arith.addf %3, %5 : vector<2x512xf32>
    %cst_5 = arith.constant 0.000000e+00 : f32
    %7 = vector.broadcast %cst_5 : f32 to vector<2x512xf32>
    %8 = arith.maximumf %6, %7 : vector<2x512xf32>
    %9 = arith.truncf %8 : vector<2x512xf32> to vector<2x512xbf16>
    %c0_6 = arith.constant 0 : index
    %c0_7 = arith.constant 0 : index
    %10 = vector.load %arg4[%c0_6, %c0_7] : memref<512x128xbf16, #tpu.memory_space<vmem>>, vector<512x128xbf16>
    %cst_8 = arith.constant dense<0.000000e+00> : vector<2x128xf32>
    %11 = tpu.matmul %9, %10, %cst_8 {dimension_numbers = #tpu.dot_dimension_numbers<[1], [0], [0], [1], [0, 0, 1, 1], [], []>} : vector<2x512xbf16>, vector<512x128xbf16>, vector<2x128xf32> -> vector<2x128xf32>
    %c0_9 = arith.constant 0 : index
    %c0_10 = arith.constant 0 : index
    %12 = vector.load %arg5[%c0_9, %c0_10] : memref<1x128xf32, #tpu.memory_space<vmem>>, vector<1x128xf32>
    %13 = vector.broadcast %12 : vector<1x128xf32> to vector<2x128xf32>
    %14 = arith.addf %11, %13 : vector<2x128xf32>
    %c0_11 = arith.constant 0 : index
    %c0_12 = arith.constant 0 : index
    %15 = vector.load %arg6[%c0_11, %c0_12] : memref<2x128xf32, #tpu.memory_space<vmem>>, vector<2x128xf32>
    tpu.vector_store %arg6[%c0_11, %c0_12], %14 {strides = array<i32>} : memref<2x128xf32, #tpu.memory_space<vmem>>, vector<2x128xf32>,
    return
  }
  func.func @transform_0(%arg0: i32) -> (i32, i32) {
    %c0_i32 = arith.constant 0 : i32
    %c0_i32_0 = arith.constant 0 : i32
    %c0_i32_1 = arith.constant 0 : i32
    return %c0_i32, %c0_i32_0 : i32, i32
  }
  func.func @transform_1(%arg0: i32) -> (i32, i32) {
    %c0_i32 = arith.constant 0 : i32
    %c0_i32_0 = arith.constant 0 : i32
    %c0_i32_1 = arith.constant 0 : i32
    return %c0_i32, %c0_i32_0 : i32, i32
  }
  func.func @transform_2(%arg0: i32) -> (i32, i32) {
    %c0_i32 = arith.constant 0 : i32
    %c0_i32_0 = arith.constant 0 : i32
    %c0_i32_1 = arith.constant 0 : i32
    return %c0_i32, %c0_i32_0 : i32, i32
  }
  func.func @transform_3(%arg0: i32) -> (i32, i32) {
    %c0_i32 = arith.constant 0 : i32
    %c0_i32_0 = arith.constant 0 : i32
    %c0_i32_1 = arith.constant 0 : i32
    return %c0_i32, %c0_i32_0 : i32, i32
  }
  func.func @transform_4(%arg0: i32) -> (i32, i32) {
    %c0_i32 = arith.constant 0 : i32
    %c0_i32_0 = arith.constant 0 : i32
    %c0_i32_1 = arith.constant 0 : i32
    return %c0_i32, %c0_i32_0 : i32, i32
  }
  func.func @transform_5(%arg0: i32) -> (i32, i32) {
    %c0_i32 = arith.constant 0 : i32
    %c0_i32_0 = arith.constant 0 : i32
    %c0_i32_1 = arith.constant 0 : i32
    return %c0_i32, %c0_i32_0 : i32, i32
  }
}

</mosaic_0001>

<llo_original>
// kernel: moco_forward.2
$region0: #{moco_forward.2}
  #allocation0 [shape = 'u32[]', space=smem, size = 0x4, offset = 0x4, fixed_abs, tag = 'smem constant byte address 0x4 - core index']
  #allocation1 [shape = 'u32[144,128]{1,0:T(1,128)}', space=vmem, size = 0x12000, scoped, tag = 'internal scratch']
  %s0 = inlined_call_operand.vmem [shape: bf16[2,256,128], index: 0, kind: input, shape index: {}]
  %s1 = inlined_call_operand.vmem [shape: bf16[128,128], index: 1, kind: input, shape index: {}]
  %s2 = inlined_call_operand.vmem [shape: f32[1,128], index: 2, kind: input, shape index: {}]
  %s3 = inlined_call_operand.vmem [shape: f32[2,1,128], index: 3, kind: output, shape index: {}]
  %s4 = sld [smem:[#allocation0]]
  $region45: #{moco_forward.2} parent=0
    _
  %s6 = ssub.s32 1, %s4
  %s7 = scalar_select 0, %s6, %s4
  loop: start=0, step=1, limit=4
  $region2: #{moco_forward.2} parent=0 // loop_pre_header
    _
  $region3: #{moco_forward.2} parent=0 // loop_header
    %s9 = sphi 0, %s13
    %p10 = scmp.ge.s32.totalorder %s9, 4
    %s19 = sphi 0, %s21
    %s22 = sphi 0, %s19
    %s23 = sphi 0, %s22
    %s39 = sphi 0, %s23
    %s43 = sphi 0, %s43
    %s45 = sphi 0, %s43
    %s46 = sphi 0, %s45
    %s60 = sphi 0, %s46
    %s64 = sphi 0, %s64
    %s66 = sphi 0, %s64
    %s67 = sphi 0, %s66
    %s81 = sphi 0, %s67
    %s87 = sphi 0, %s89
    %s90 = sphi 0, %s87
    %s91 = sphi 0, %s90
    %s107 = sphi 0, %s91
  $region4: #{moco_forward.2} parent=0 // loop_header_branch
    %12 = sbr.rel (%p10) target = $region8
  $region5: #{moco_forward.2} parent=0 // loop_body
    %s14 = ssub.s32 %s9, 1
    %s15 = ssub.s32 %s9, 2
    %s16 = sadd.s32 %s9, 1
    %s17 = ssub.s32 %s9, %s16
    %p18 = scmp.eq.s32.totalorder %s17, 0
    %s20 = sadd.s32 %s19, 1
    %s21 = scalar_select %p18, %s19, %s20
    %p24 = pneg %p18
    %p25 = scmp.eq.s32.totalorder %s9, 1
    %p26 = por %p24, %p25
    %p27 = scmp.ne.s32.totalorder %s19, %s22
    %p28 = scmp.eq.s32.totalorder %s9, 0
    %p29 = por %p27, %p28
    %p30 = scmp.ne.s32.totalorder %s19, %s22
    %p31 = scmp.eq.s32.totalorder %s14, 1
    %p32 = por %p30, %p31
    %p33 = scmp.ne.s32.totalorder %s22, %s23
    %p34 = scmp.eq.s32.totalorder %s14, 0
    %p35 = por %p33, %p34
    %p36 = scmp.ne.s32.totalorder %s22, %s23
    %p37 = scmp.eq.s32.totalorder %s15, 1
    %p38 = por %p36, %p37
    %p40 = scmp.ne.s32.totalorder %s23, %s39
    %p41 = scmp.eq.s32.totalorder %s15, 0
    %p42 = por %p40, %p41
    %s44 = sadd.s32 %s43, 1
    %p47 = scmp.eq.s32.totalorder %s9, 1
    %p48 = scmp.ne.s32.totalorder %s43, %s45
    %p49 = scmp.eq.s32.totalorder %s9, 0
    %p50 = por %p48, %p49
    %p51 = scmp.ne.s32.totalorder %s43, %s45
    %p52 = scmp.eq.s32.totalorder %s14, 1
    %p53 = por %p51, %p52
    %p54 = scmp.ne.s32.totalorder %s45, %s46
    %p55 = scmp.eq.s32.totalorder %s14, 0
    %p56 = por %p54, %p55
    %p57 = scmp.ne.s32.totalorder %s45, %s46
    %p58 = scmp.eq.s32.totalorder %s15, 1
    %p59 = por %p57, %p58
    %p61 = scmp.ne.s32.totalorder %s46, %s60
    %p62 = scmp.eq.s32.totalorder %s15, 0
    %p63 = por %p61, %p62
    %s65 = sadd.s32 %s64, 1
    %p68 = scmp.eq.s32.totalorder %s9, 1
    %p69 = scmp.ne.s32.totalorder %s64, %s66
    %p70 = scmp.eq.s32.totalorder %s9, 0
    %p71 = por %p69, %p70
    %p72 = scmp.ne.s32.totalorder %s64, %s66
    %p73 = scmp.eq.s32.totalorder %s14, 1
    %p74 = por %p72, %p73
    %p75 = scmp.ne.s32.totalorder %s66, %s67
    %p76 = scmp.eq.s32.totalorder %s14, 0
    %p77 = por %p75, %p76
    %p78 = scmp.ne.s32.totalorder %s66, %s67
    %p79 = scmp.eq.s32.totalorder %s15, 1
    %p80 = por %p78, %p79
    %p82 = scmp.ne.s32.totalorder %s67, %s81
    %p83 = scmp.eq.s32.totalorder %s15, 0
    %p84 = por %p82, %p83
    %s85 = ssub.s32 %s9, %s16
    %p86 = scmp.eq.s32.totalorder %s85, 0
    %s88 = sadd.s32 %s87, 1
    %s89 = scalar_select %p86, %s87, %s88
    %p92 = pneg %p86
    %p93 = scmp.eq.s32.totalorder %s9, 1
    %p94 = por %p92, %p93
    %p95 = scmp.ne.s32.totalorder %s87, %s90
    %p96 = scmp.eq.s32.totalorder %s9, 0
    %p97 = por %p95, %p96
    %p98 = scmp.ne.s32.totalorder %s87, %s90
    %p99 = scmp.eq.s32.totalorder %s14, 1
    %p100 = por %p98, %p99
    %p101 = scmp.ne.s32.totalorder %s90, %s91
    %p102 = scmp.eq.s32.totalorder %s14, 0
    %p103 = por %p101, %p102
    %p104 = scmp.ne.s32.totalorder %s90, %s91
    %p105 = scmp.eq.s32.totalorder %s15, 1
    %p106 = por %p104, %p105
    %p108 = scmp.ne.s32.totalorder %s91, %s107
    %p109 = scmp.eq.s32.totalorder %s15, 0
    %p110 = por %p108, %p109
    %p111 = scmp.le.s32.totalorder 1, %s9
    %p112 = scmp.lt.s32.totalorder %s9, 3
    %p113 = pnand %p111, %p112
    %p114 = pneg %p113
    // Predicated region
    $region9: #{moco_forward.2} parent=5 // pred_check
      _
    $region10: #{moco_forward.2} parent=5 // pred_check_branch
      %116 = sbr.rel (%p113) target = $region12
    $region11: #{moco_forward.2} parent=5 // pred_region
      %s117 = ssub.s32 %s9, 1
      // Predicated region
      $region13: #{moco_forward.2} parent=11 // pred_check
        %p118 = pneg %p56
      $region14: #{moco_forward.2} parent=11 // pred_check_branch
        %120 = sbr.rel (%p118) target = $region16
      $region15: #{moco_forward.2} parent=11 // pred_region
        _
      $region16: #{moco_forward.2} parent=11 // pred_fallthru
        _
      // Predicated region
      $region17: #{moco_forward.2} parent=11 // pred_check
        %p121 = pneg %p77
      $region18: #{moco_forward.2} parent=11 // pred_check_branch
        %123 = sbr.rel (%p121) target = $region20
      $region19: #{moco_forward.2} parent=11 // pred_region
        _
      $region20: #{moco_forward.2} parent=11 // pred_fallthru
        _
    $region12: #{moco_forward.2} parent=5 // pred_fallthru
      _
    %p124 = scmp.lt.s32.totalorder %s9, 2
    // Predicated region
    $region21: #{moco_forward.2} parent=5 // pred_check
      %p125 = pneg %p124
    $region22: #{moco_forward.2} parent=5 // pred_check_branch
      %127 = sbr.rel (%p125) target = $region24
    $region23: #{moco_forward.2} parent=5 // pred_region
      // Predicated region
      $region25: #{moco_forward.2} parent=23 // pred_check
        %p128 = pneg %p29
      $region26: #{moco_forward.2} parent=23 // pred_check_branch
        %130 = sbr.rel (%p128) target = $region28
      $region27: #{moco_forward.2} parent=23 // pred_region
        %p131 = scmp.lt.s32.totalorder %s9, 1
        %s132 = scalar_select %p131, %s9, 1
        %s133 = smul.addr %s132, 32
        %s134 = smul.addr %s133, 4
        %s135 = scalar_lea.vmem %s0, %s134
      $region28: #{moco_forward.2} parent=23 // pred_fallthru
        _
    $region24: #{moco_forward.2} parent=5 // pred_fallthru
      _
    %p136 = scmp.le.s32.totalorder 1, %s9
    %p137 = scmp.lt.s32.totalorder %s9, 3
    %p138 = pnand %p136, %p137
    %p139 = pneg %p138
    // Predicated region
    $region29: #{moco_forward.2} parent=5 // pred_check
      _
    $region30: #{moco_forward.2} parent=5 // pred_check_branch
      %141 = sbr.rel (%p138) target = $region32
    $region31: #{moco_forward.2} parent=5 // pred_region
      %s142 = ssub.s32 %s9, 1
      %p143 = scmp.lt.s32.totalorder %s14, 1
      %s144 = scalar_select %p143, %s14, 1
      %s145 = smul.addr %s144, 32
      %s146 = smul.addr %s145, 4
      %s147 = scalar_lea.vmem %s0, %s146
      %p148 = pneg %p35
      %p149 = pneg %p32
      %p150 = pneg %p56
      %p151 = pneg %p53
      %p152 = pneg %p77
      %p153 = pneg %p74
      %p154 = pneg %p103
      %p155 = pneg %p100
      %p156 = scmp.lt.s32.totalorder %s14, 1
      %s157 = scalar_select %p156, %s14, 1
      %s158 = scalar_lea.vmem %s3, %s157
      %p159 = scmp.lt.s32.totalorder %s14, 1
      %s160 = scalar_select %p159, %s14, 1
      %s161 = smul.addr %s160, 32
      %s162 = smul.addr %s161, 4
      %s163 = scalar_lea.vmem %s0, %s162
      %p164 = scmp.lt.s32.totalorder %s14, 1
      %s165 = scalar_select %p164, %s14, 1
      %s166 = scalar_lea.vmem %s3, %s165
      %v168 = vld [vmem:[%s1] sm:$0xf]
      %v169 = vld [vmem:[%s1 + $0x4] sm:$0xf]
      %v170 = vld [vmem:[%s1 + $0x8] sm:$0xf]
      %v171 = vld [vmem:[%s1 + $0xc] sm:$0xf]
      %v172 = vld [vmem:[%s1 + $0x10] sm:$0xf]
      %v173 = vld [vmem:[%s1 + $0x14] sm:$0xf]
      %v174 = vld [vmem:[%s1 + $0x18] sm:$0xf]
      %v175 = vld [vmem:[%s1 + $0x1c] sm:$0xf]
      %v176 = vld [vmem:[%s1 + $0x20] sm:$0xf]
      %v177 = vld [vmem:[%s1 + $0x24] sm:$0xf]
      %v178 = vld [vmem:[%s1 + $0x28] sm:$0xf]
      %v179 = vld [vmem:[%s1 + $0x2c] sm:$0xf]
      %v180 = vld [vmem:[%s1 + $0x30] sm:$0xf]
      %v181 = vld [vmem:[%s1 + $0x34] sm:$0xf]
      %v182 = vld [vmem:[%s1 + $0x38] sm:$0xf]
      %v183 = vld [vmem:[%s1 + $0x3c] sm:$0xf]
      %v184 = vld [vmem:[%s2] sm:$0x1]
      %v185 = vld [vmem:[%s163] sm:$0xf]
      %v186 = vld [vmem:[%s163 + $0x4] sm:$0xf]
      %v187 = vld [vmem:[%s163 + $0x8] sm:$0xf]
      %v188 = vld [vmem:[%s163 + $0xc] sm:$0xf]
      %v189 = vld [vmem:[%s163 + $0x10] sm:$0xf]
      %v190 = vld [vmem:[%s163 + $0x14] sm:$0xf]
      %v191 = vld [vmem:[%s163 + $0x18] sm:$0xf]
      %v192 = vld [vmem:[%s163 + $0x1c] sm:$0xf]
      %v193 = vld [vmem:[%s163 + $0x20] sm:$0xf]
      %v194 = vld [vmem:[%s163 + $0x24] sm:$0xf]
      %v195 = vld [vmem:[%s163 + $0x28] sm:$0xf]
      %v196 = vld [vmem:[%s163 + $0x2c] sm:$0xf]
      %v197 = vld [vmem:[%s163 + $0x30] sm:$0xf]
      %v198 = vld [vmem:[%s163 + $0x34] sm:$0xf]
      %v199 = vld [vmem:[%s163 + $0x38] sm:$0xf]
      %v200 = vld [vmem:[%s163 + $0x3c] sm:$0xf]
      %v202 = vlaneseq
      %v203 = vshrl.u32 %v202, 7
      %v204 = vsub.s32 0, %v203
      %v205 = vrot.slane %v184, %v204
      %v223 = vunpack.c.l.b16 %v185
      %v224 = vunpack.c.l.b16 %v186
      %v225 = vunpack.c.l.b16 %v187
      %v226 = vunpack.c.l.b16 %v188
      %v227 = vunpack.c.l.b16 %v189
      %v228 = vunpack.c.l.b16 %v190
      %v229 = vunpack.c.l.b16 %v191
      %v230 = vunpack.c.l.b16 %v192
      %v231 = vunpack.c.l.b16 %v193
      %v232 = vunpack.c.l.b16 %v194
      %v233 = vunpack.c.l.b16 %v195
      %v234 = vunpack.c.l.b16 %v196
      %v235 = vunpack.c.l.b16 %v197
      %v236 = vunpack.c.l.b16 %v198
      %v237 = vunpack.c.l.b16 %v199
      %v238 = vunpack.c.l.b16 %v200
      %v239 = vpack.c.b16 %v224, %v223
      %v240 = vpack.c.b16 %v226, %v225
      %v241 = vpack.c.b16 %v228, %v227
      %v242 = vpack.c.b16 %v230, %v229
      %v243 = vpack.c.b16 %v232, %v231
      %v244 = vpack.c.b16 %v234, %v233
      %v245 = vpack.c.b16 %v236, %v235
      %v246 = vpack.c.b16 %v238, %v237
      %v271 = vunpack.c.l.b16 %v168
      %v272 = vunpack.c.l.b16 %v169
      %v273 = vunpack.c.l.b16 %v170
      %v274 = vunpack.c.l.b16 %v171
      %v275 = vunpack.c.l.b16 %v172
      %v276 = vunpack.c.l.b16 %v173
      %v277 = vunpack.c.l.b16 %v174
      %v278 = vunpack.c.l.b16 %v175
      %v279 = vunpack.c.l.b16 %v176
      %v280 = vunpack.c.l.b16 %v177
      %v281 = vunpack.c.l.b16 %v178
      %v282 = vunpack.c.l.b16 %v179
      %v283 = vunpack.c.l.b16 %v180
      %v284 = vunpack.c.l.b16 %v181
      %v285 = vunpack.c.l.b16 %v182
      %v286 = vunpack.c.l.b16 %v183
      %v287 = vpack.c.b16 %v272, %v271
      %v288 = vpack.c.b16 %v274, %v273
      %v289 = vpack.c.b16 %v276, %v275
      %v290 = vpack.c.b16 %v278, %v277
      %v291 = vpack.c.b16 %v280, %v279
      %v292 = vpack.c.b16 %v282, %v281
      %v293 = vpack.c.b16 %v284, %v283
      %v294 = vpack.c.b16 %v286, %v285
      %303 = vmatprep.subr.bf16.mxu0 0
      %304 = vmatpush1.bf16.msra.mxu0 %v287
      %305 = vmatprep.subr.bf16.mxu0 0
      %306 = vmatpush1.bf16.msra.mxu0 %v288
      %307 = vmatprep.subr.bf16.mxu0 0
      %308 = vmatpush1.bf16.msra.mxu0 %v289
      %309 = vmatprep.subr.bf16.mxu0 0
      %310 = vmatpush1.bf16.msra.mxu0 %v290
      %311 = vmatprep.subr.bf16.mxu0 0
      %312 = vmatpush1.bf16.msra.mxu0 %v291
      %313 = vmatprep.subr.bf16.mxu0 0
      %314 = vmatpush1.bf16.msra.mxu0 %v292
      %315 = vmatprep.subr.bf16.mxu0 0
      %316 = vmatpush1.bf16.msra.mxu0 %v293
      %317 = vmatprep.subr.bf16.mxu0 0
      %318 = vmatpush1.bf16.msra.mxu0 %v294
      %319 = vmatprep.subr.bf16.mxu0 0
      %320 = vmatpush1.bf16.msra.mxu0 0
      %321 = vmatprep.subr.bf16.mxu0 0
      %322 = vmatpush1.bf16.msra.mxu0 0
      %323 = vmatprep.subr.bf16.mxu0 0
      %324 = vmatpush1.bf16.msra.mxu0 0
      %325 = vmatprep.subr.bf16.mxu0 0
      %326 = vmatpush1.bf16.msra.mxu0 0
      %327 = vmatprep.subr.bf16.mxu0 0
      %328 = vmatpush1.bf16.msra.mxu0 0
      %329 = vmatprep.subr.bf16.mxu0 0
      %330 = vmatpush1.bf16.msra.mxu0 0
      %331 = vmatprep.subr.bf16.mxu0 0
      %332 = vmatpush1.bf16.msra.mxu0 0
      %333 = vmatprep.subr.bf16.mxu0 0
      %334 = vmatpush1.bf16.msra.mxu0 0
      %335 = vmatprep.mubr.bf16.mxu0 0
      %336 = vmatmul.mubr.bf16.gmra.mrb[0].mxu0 %v239
      %v337 = vpop.f32.mrb[0].mxu0
      %v338 = vadd.f32 %v205, %v337
      %v339 = vpop.f32.mrb[0].mxu0
      %v340 = vpop.f32.mrb[0].mxu0
      %v341 = vadd.f32 %v205, %v340
      %v342 = vpop.f32.mrb[0].mxu0
      %343 = vmatprep.mubr.bf16.mxu0 0
      %344 = vmatmul.mubr.bf16.gmra.mrb[0].mxu0 %v240
      %v345 = vpop.f32.mrb[0].mxu0
      %v346 = vadd.f32 %v205, %v345
      %v347 = vpop.f32.mrb[0].mxu0
      %v348 = vpop.f32.mrb[0].mxu0
      %v349 = vadd.f32 %v205, %v348
      %v350 = vpop.f32.mrb[0].mxu0
      %351 = vmatprep.mubr.bf16.mxu0 0
      %352 = vmatmul.mubr.bf16.gmra.mrb[0].mxu0 %v241
      %v353 = vpop.f32.mrb[0].mxu0
      %v354 = vadd.f32 %v205, %v353
      %v355 = vpop.f32.mrb[0].mxu0
      %v356 = vpop.f32.mrb[0].mxu0
      %v357 = vadd.f32 %v205, %v356
      %v358 = vpop.f32.mrb[0].mxu0
      %359 = vmatprep.mubr.bf16.mxu0 0
      %360 = vmatmul.mubr.bf16.gmra.mrb[0].mxu0 %v242
      %v361 = vpop.f32.mrb[0].mxu0
      %v362 = vadd.f32 %v205, %v361
      %v363 = vpop.f32.mrb[0].mxu0
      %v364 = vpop.f32.mrb[0].mxu0
      %v365 = vadd.f32 %v205, %v364
      %v366 = vpop.f32.mrb[0].mxu0
      %367 = vmatprep.mubr.bf16.mxu0 0
      %368 = vmatmul.mubr.bf16.gmra.mrb[0].mxu0 %v243
      %v369 = vpop.f32.mrb[0].mxu0
      %v370 = vadd.f32 %v205, %v369
      %v371 = vpop.f32.mrb[0].mxu0
      %v372 = vpop.f32.mrb[0].mxu0
      %v373 = vadd.f32 %v205, %v372
      %v374 = vpop.f32.mrb[0].mxu0
      %375 = vmatprep.mubr.bf16.mxu0 0
      %376 = vmatmul.mubr.bf16.gmra.mrb[0].mxu0 %v244
      %v377 = vpop.f32.mrb[0].mxu0
      %v378 = vadd.f32 %v205, %v377
      %v379 = vpop.f32.mrb[0].mxu0
      %v380 = vpop.f32.mrb[0].mxu0
      %v381 = vadd.f32 %v205, %v380
      %v382 = vpop.f32.mrb[0].mxu0
      %383 = vmatprep.mubr.bf16.mxu0 0
      %384 = vmatmul.mubr.bf16.gmra.mrb[0].mxu0 %v245
      %v385 = vpop.f32.mrb[0].mxu0
      %v386 = vadd.f32 %v205, %v385
      %v387 = vpop.f32.mrb[0].mxu0
      %v388 = vpop.f32.mrb[0].mxu0
      %v389 = vadd.f32 %v205, %v388
      %v390 = vpop.f32.mrb[0].mxu0
      %391 = vmatprep.mubr.bf16.mxu0 0
      %392 = vmatmul.mubr.bf16.gmra.mrb[0].mxu0 %v246
      %v393 = vpop.f32.mrb[0].mxu0
      %v394 = vadd.f32 %v205, %v393
      %v395 = vpop.f32.mrb[0].mxu0
      %v396 = vpop.f32.mrb[0].mxu0
      %v397 = vadd.f32 %v205, %v396
      %v398 = vpop.f32.mrb[0].mxu0
      %399 = vdwg.mxu0
      %v400 = vmax.f32 %v338, 0.0
      %v401 = vmax.f32 %v341, 0.0
      %v402 = vmax.f32 %v346, 0.0
      %v403 = vmax.f32 %v349, 0.0
      %v404 = vmax.f32 %v354, 0.0
      %v405 = vmax.f32 %v357, 0.0
      %v406 = vmax.f32 %v362, 0.0
      %v407 = vmax.f32 %v365, 0.0
      %v408 = vmax.f32 %v370, 0.0
      %v409 = vmax.f32 %v373, 0.0
      %v410 = vmax.f32 %v378, 0.0
      %v411 = vmax.f32 %v381, 0.0
      %v412 = vmax.f32 %v386, 0.0
      %v413 = vmax.f32 %v389, 0.0
      %v414 = vmax.f32 %v394, 0.0
      %v415 = vmax.f32 %v397, 0.0
      %v416 = vadd.f32 %v400, %v401
      %v417 = vadd.f32 %v416, %v402
      %v418 = vadd.f32 %v417, %v403
      %v419 = vadd.f32 %v418, %v404
      %v420 = vadd.f32 %v419, %v405
      %v421 = vadd.f32 %v420, %v406
      %v422 = vadd.f32 %v421, %v407
      %v423 = vadd.f32 %v422, %v408
      %v424 = vadd.f32 %v423, %v409
      %v425 = vadd.f32 %v424, %v410
      %v426 = vadd.f32 %v425, %v411
      %v427 = vadd.f32 %v426, %v412
      %v428 = vadd.f32 %v427, %v413
      %v429 = vadd.f32 %v428, %v414
      %v430 = vadd.f32 %v429, %v415
      %v431 = vrot.slane %v430, 4
      %v432 = vadd.f32 %v430, %v431
      %v433 = vrot.slane %v432, 2
      %v434 = vadd.f32 %v432, %v433
      %v435 = vrot.slane %v434, 1
      %v436 = vadd.f32 %v434, %v435
      %v437 = vadd.f32 %v436, 0.0
      %v438 = vld [vmem:[%s163 + $0x40] sm:$0xf]
      %v439 = vld [vmem:[%s163 + $0x44] sm:$0xf]
      %v440 = vld [vmem:[%s163 + $0x48] sm:$0xf]
      %v441 = vld [vmem:[%s163 + $0x4c] sm:$0xf]
      %v442 = vld [vmem:[%s163 + $0x50] sm:$0xf]
      %v443 = vld [vmem:[%s163 + $0x54] sm:$0xf]
      %v444 = vld [vmem:[%s163 + $0x58] sm:$0xf]
      %v445 = vld [vmem:[%s163 + $0x5c] sm:$0xf]
      %v446 = vld [vmem:[%s163 + $0x60] sm:$0xf]
      %v447 = vld [vmem:[%s163 + $0x64] sm:$0xf]
      %v448 = vld [vmem:[%s163 + $0x68] sm:$0xf]
      %v449 = vld [vmem:[%s163 + $0x6c] sm:$0xf]
      %v450 = vld [vmem:[%s163 + $0x70] sm:$0xf]
      %v451 = vld [vmem:[%s163 + $0x74] sm:$0xf]
      %v452 = vld [vmem:[%s163 + $0x78] sm:$0xf]
      %v453 = vld [vmem:[%s163 + $0x7c] sm:$0xf]
      %v470 = vunpack.c.l.b16 %v438
      %v471 = vunpack.c.l.b16 %v439
      %v472 = vunpack.c.l.b16 %v440
      %v473 = vunpack.c.l.b16 %v441
      %v474 = vunpack.c.l.b16 %v442
      %v475 = vunpack.c.l.b16 %v443
      %v476 = vunpack.c.l.b16 %v444
      %v477 = vunpack.c.l.b16 %v445
      %v478 = vunpack.c.l.b16 %v446
      %v479 = vunpack.c.l.b16 %v447
      %v480 = vunpack.c.l.b16 %v448
      %v481 = vunpack.c.l.b16 %v449
      %v482 = vunpack.c.l.b16 %v450
      %v483 = vunpack.c.l.b16 %v451
      %v484 = vunpack.c.l.b16 %v452
      %v485 = vunpack.c.l.b16 %v453
      %v486 = vpack.c.b16 %v471, %v470
      %v487 = vpack.c.b16 %v473, %v472
      %v488 = vpack.c.b16 %v475, %v474
      %v489 = vpack.c.b16 %v477, %v476
      %v490 = vpack.c.b16 %v479, %v478
      %v491 = vpack.c.b16 %v481, %v480
      %v492 = vpack.c.b16 %v483, %v482
      %v493 = vpack.c.b16 %v485, %v484
      %502 = vmatprep.subr.bf16.mxu0 0
      %503 = vmatpush1.bf16.msra.mxu0 %v287
      %504 = vmatprep.subr.bf16.mxu0 0
      %505 = vmatpush1.bf16.msra.mxu0 %v288
      %506 = vmatprep.subr.bf16.mxu0 0
      %507 = vmatpush1.bf16.msra.mxu0 %v289
      %508 = vmatprep.subr.bf16.mxu0 0
      %509 = vmatpush1.bf16.msra.mxu0 %v290
      %510 = vmatprep.subr.bf16.mxu0 0
      %511 = vmatpush1.bf16.msra.mxu0 %v291
      %512 = vmatprep.subr.bf16.mxu0 0
      %513 = vmatpush1.bf16.msra.mxu0 %v292
      %514 = vmatprep.subr.bf16.mxu0 0
      %515 = vmatpush1.bf16.msra.mxu0 %v293
      %516 = vmatprep.subr.bf16.mxu0 0
      %517 = vmatpush1.bf16.msra.mxu0 %v294
      %518 = vmatprep.subr.bf16.mxu0 0
      %519 = vmatpush1.bf16.msra.mxu0 0
      %520 = vmatprep.subr.bf16.mxu0 0
      %521 = vmatpush1.bf16.msra.mxu0 0
      %522 = vmatprep.subr.bf16.mxu0 0
      %523 = vmatpush1.bf16.msra.mxu0 0
      %524 = vmatprep.subr.bf16.mxu0 0
      %525 = vmatpush1.bf16.msra.mxu0 0
      %526 = vmatprep.subr.bf16.mxu0 0
      %527 = vmatpush1.bf16.msra.mxu0 0
      %528 = vmatprep.subr.bf16.mxu0 0
      %529 = vmatpush1.bf16.msra.mxu0 0
      %530 = vmatprep.subr.bf16.mxu0 0
      %531 = vmatpush1.bf16.msra.mxu0 0
      %532 = vmatprep.subr.bf16.mxu0 0
      %533 = vmatpush1.bf16.msra.mxu0 0
      %534 = vmatprep.mubr.bf16.mxu0 0
      %535 = vmatmul.mubr.bf16.gmra.mrb[0].mxu0 %v486
      %v536 = vpop.f32.mrb[0].mxu0
      %v537 = vadd.f32 %v205, %v536
      %v538 = vpop.f32.mrb[0].mxu0
      %v539 = vpop.f32.mrb[0].mxu0
      %v540 = vadd.f32 %v205, %v539
      %v541 = vpop.f32.mrb[0].mxu0
      %542 = vmatprep.mubr.bf16.mxu0 0
      %543 = vmatmul.mubr.bf16.gmra.mrb[0].mxu0 %v487
      %v544 = vpop.f32.mrb[0].mxu0
      %v545 = vadd.f32 %v205, %v544
      %v546 = vpop.f32.mrb[0].mxu0
      %v547 = vpop.f32.mrb[0].mxu0
      %v548 = vadd.f32 %v205, %v547
      %v549 = vpop.f32.mrb[0].mxu0
      %550 = vmatprep.mubr.bf16.mxu0 0
      %551 = vmatmul.mubr.bf16.gmra.mrb[0].mxu0 %v488
      %v552 = vpop.f32.mrb[0].mxu0
      %v553 = vadd.f32 %v205, %v552
      %v554 = vpop.f32.mrb[0].mxu0
      %v555 = vpop.f32.mrb[0].mxu0
      %v556 = vadd.f32 %v205, %v555
      %v557 = vpop.f32.mrb[0].mxu0
      %558 = vmatprep.mubr.bf16.mxu0 0
      %559 = vmatmul.mubr.bf16.gmra.mrb[0].mxu0 %v489
      %v560 = vpop.f32.mrb[0].mxu0
      %v561 = vadd.f32 %v205, %v560
      %v562 = vpop.f32.mrb[0].mxu0
      %v563 = vpop.f32.mrb[0].mxu0
      %v564 = vadd.f32 %v205, %v563
      %v565 = vpop.f32.mrb[0].mxu0
      %566 = vmatprep.mubr.bf16.mxu0 0
      %567 = vmatmul.mubr.bf16.gmra.mrb[0].mxu0 %v490
      %v568 = vpop.f32.mrb[0].mxu0
      %v569 = vadd.f32 %v205, %v568
      %v570 = vpop.f32.mrb[0].mxu0
      %v571 = vpop.f32.mrb[0].mxu0
      %v572 = vadd.f32 %v205, %v571
      %v573 = vpop.f32.mrb[0].mxu0
      %574 = vmatprep.mubr.bf16.mxu0 0
      %575 = vmatmul.mubr.bf16.gmra.mrb[0].mxu0 %v491
      %v576 = vpop.f32.mrb[0].mxu0
      %v577 = vadd.f32 %v205, %v576
      %v578 = vpop.f32.mrb[0].mxu0
      %v579 = vpop.f32.mrb[0].mxu0
      %v580 = vadd.f32 %v205, %v579
      %v581 = vpop.f32.mrb[0].mxu0
      %582 = vmatprep.mubr.bf16.mxu0 0
      %583 = vmatmul.mubr.bf16.gmra.mrb[0].mxu0 %v492
      %v584 = vpop.f32.mrb[0].mxu0
      %v585 = vadd.f32 %v205, %v584
      %v586 = vpop.f32.mrb[0].mxu0
      %v587 = vpop.f32.mrb[0].mxu0
      %v588 = vadd.f32 %v205, %v587
      %v589 = vpop.f32.mrb[0].mxu0
      %590 = vmatprep.mubr.bf16.mxu0 0
      %591 = vmatmul.mubr.bf16.gmra.mrb[0].mxu0 %v493
      %v592 = vpop.f32.mrb[0].mxu0
      %v593 = vadd.f32 %v205, %v592
      %v594 = vpop.f32.mrb[0].mxu0
      %v595 = vpop.f32.mrb[0].mxu0
      %v596 = vadd.f32 %v205, %v595
      %v597 = vpop.f32.mrb[0].mxu0
      %598 = vdwg.mxu0
      %v599 = vmax.f32 %v537, 0.0
      %v600 = vmax.f32 %v540, 0.0
      %v601 = vmax.f32 %v545, 0.0
      %v602 = vmax.f32 %v548, 0.0
      %v603 = vmax.f32 %v553, 0.0
      %v604 = vmax.f32 %v556, 0.0
      %v605 = vmax.f32 %v561, 0.0
      %v606 = vmax.f32 %v564, 0.0
      %v607 = vmax.f32 %v569, 0.0
      %v608 = vmax.f32 %v572, 0.0
      %v609 = vmax.f32 %v577, 0.0
      %v610 = vmax.f32 %v580, 0.0
      %v611 = vmax.f32 %v585, 0.0
      %v612 = vmax.f32 %v588, 0.0
      %v613 = vmax.f32 %v593, 0.0
      %v614 = vmax.f32 %v596, 0.0
      %v615 = vadd.f32 %v599, %v600
      %v616 = vadd.f32 %v615, %v601
      %v617 = vadd.f32 %v616, %v602
      %v618 = vadd.f32 %v617, %v603
      %v619 = vadd.f32 %v618, %v604
      %v620 = vadd.f32 %v619, %v605
      %v621 = vadd.f32 %v620, %v606
      %v622 = vadd.f32 %v621, %v607
      %v623 = vadd.f32 %v622, %v608
      %v624 = vadd.f32 %v623, %v609
      %v625 = vadd.f32 %v624, %v610
      %v626 = vadd.f32 %v625, %v611
      %v627 = vadd.f32 %v626, %v612
      %v628 = vadd.f32 %v627, %v613
      %v629 = vadd.f32 %v628, %v614
      %v630 = vrot.slane %v629, 4
      %v631 = vadd.f32 %v629, %v630
      %v632 = vrot.slane %v631, 2
      %v633 = vadd.f32 %v631, %v632
      %v634 = vrot.slane %v633, 1
      %v635 = vadd.f32 %v633, %v634
      %v636 = vadd.f32 %v437, %v635
      %v637 = vmul.f32 %v636, 0.00390625
      %638 = vst [vmem:[%s166] sm:$0x1] %v637
      %p639 = scmp.lt.s32.totalorder %s14, 1
      %s640 = scalar_select %p639, %s14, 1
      %s641 = scalar_lea.vmem %s3, %s640
      // Predicated region
      $region33: #{moco_forward.2} parent=31 // pred_check
        %p642 = pneg %p100
      $region34: #{moco_forward.2} parent=31 // pred_check_branch
        %644 = sbr.rel (%p642) target = $region36
      $region35: #{moco_forward.2} parent=31 // pred_region
        _
      $region36: #{moco_forward.2} parent=31 // pred_fallthru
        _
    $region32: #{moco_forward.2} parent=5 // pred_fallthru
      _
    %p645 = scmp.le.s32.totalorder 2, %s9
    // Predicated region
    $region37: #{moco_forward.2} parent=5 // pred_check
      %p646 = pneg %p645
    $region38: #{moco_forward.2} parent=5 // pred_check_branch
      %648 = sbr.rel (%p646) target = $region40
    $region39: #{moco_forward.2} parent=5 // pred_region
      %s649 = ssub.s32 %s9, 2
      // Predicated region
      $region41: #{moco_forward.2} parent=39 // pred_check
        %p650 = pneg %p106
      $region42: #{moco_forward.2} parent=39 // pred_check_branch
        %652 = sbr.rel (%p650) target = $region44
      $region43: #{moco_forward.2} parent=39 // pred_region
        %p653 = scmp.lt.s32.totalorder %s15, 1
        %s654 = scalar_select %p653, %s15, 1
        %s655 = scalar_lea.vmem %s3, %s654
      $region44: #{moco_forward.2} parent=39 // pred_fallthru
        _
    $region40: #{moco_forward.2} parent=5 // pred_fallthru
      _
  $region6: #{moco_forward.2} parent=0 // loop_footer
    %s13 = sadd.s32 1, %s9
  $region7: #{moco_forward.2} parent=0 // loop_footer_branch
    %8 = sbr.rel target = $region3
  $region8: #{moco_forward.2} parent=0 // loop_exit
    _

// kernel: moco_forward.3
$region0: #{moco_forward.3}
  #allocation0 [shape = 'u32[]', space=smem, size = 0x4, offset = 0x4, fixed_abs, tag = 'smem constant byte address 0x4 - core index']
  #allocation1 [shape = 'u32[144,128]{1,0:T(1,128)}', space=vmem, size = 0x12000, scoped, tag = 'internal scratch']
  %s0 = inlined_call_operand.vmem [shape: f32[2,128], index: 0, kind: input, shape index: {}]
  %s1 = inlined_call_operand.vmem [shape: bf16[128,512], index: 1, kind: input, shape index: {}]
  %s2 = inlined_call_operand.vmem [shape: f32[1,512], index: 2, kind: input, shape index: {}]
  %s3 = inlined_call_operand.vmem [shape: bf16[512,128], index: 3, kind: input, shape index: {}]
  %s4 = inlined_call_operand.vmem [shape: f32[1,128], index: 4, kind: input, shape index: {}]
  %s5 = inlined_call_operand.hbm [shape: f32[2,128], index: 5, kind: output, shape index: {}]
  %s6 = sld [smem:[#allocation0]]
  $region30: #{moco_forward.3} parent=0
    _
  %s8 = ssub.s32 1, %s6
  %s9 = scalar_select 0, %s8, %s6
  $region1: #{moco_forward.3} parent=0
    #allocation2 [shape = 'u8[1024]{0}', space=vmem, size = 0x400, scoped, tag = 'output window, operand 0, single buffered']
    #allocation3 [shape = 's32[1]{0}', space=sflag, size = 0x4, scoped, tag = 'scoped memory for moco_forward.3']
    %10 = vsyncpa [#allocation3], 0
    // Predicated region
    $region2: #{moco_forward.3} parent=1 // pred_check
      _
    $region3: #{moco_forward.3} parent=1 // pred_check_branch
      %12 = sbr.rel (0) target = $region5
    $region4: #{moco_forward.3} parent=1 // pred_region
      _
    $region5: #{moco_forward.3} parent=1 // pred_fallthru
      _
    // Predicated region
    $region6: #{moco_forward.3} parent=1 // pred_check
      _
    $region7: #{moco_forward.3} parent=1 // pred_check_branch
      %14 = sbr.rel (0) target = $region9
    $region8: #{moco_forward.3} parent=1 // pred_region
      _
    $region9: #{moco_forward.3} parent=1 // pred_fallthru
      _
    // Predicated region
    $region10: #{moco_forward.3} parent=1 // pred_check
      _
    $region11: #{moco_forward.3} parent=1 // pred_check_branch
      %16 = sbr.rel (0) target = $region13
    $region12: #{moco_forward.3} parent=1 // pred_region
      _
    $region13: #{moco_forward.3} parent=1 // pred_fallthru
      _
    // Predicated region
    $region14: #{moco_forward.3} parent=1 // pred_check
      _
    $region15: #{moco_forward.3} parent=1 // pred_check_branch
      %18 = sbr.rel (0) target = $region17
    $region16: #{moco_forward.3} parent=1 // pred_region
      _
    $region17: #{moco_forward.3} parent=1 // pred_fallthru
      _
    // Predicated region
    $region18: #{moco_forward.3} parent=1 // pred_check
      _
    $region19: #{moco_forward.3} parent=1 // pred_check_branch
      %20 = sbr.rel (0) target = $region21
    $region20: #{moco_forward.3} parent=1 // pred_region
      _
    $region21: #{moco_forward.3} parent=1 // pred_fallthru
      _
    %v22 = vld [vmem:[%s0] sm:$0x3]
    %v23 = vpack.c.bf16 %v22, %v22
    %v24 = vld [vmem:[%s1] sm:$0xff]
    %v25 = vld [vmem:[%s1 + $0x8] sm:$0xff]
    %v26 = vld [vmem:[%s1 + $0x10] sm:$0xff]
    %v27 = vld [vmem:[%s1 + $0x18] sm:$0xff]
    %v28 = vld [vmem:[%s1 + $0x20] sm:$0xff]
    %v29 = vld [vmem:[%s1 + $0x28] sm:$0xff]
    %v30 = vld [vmem:[%s1 + $0x30] sm:$0xff]
    %v31 = vld [vmem:[%s1 + $0x38] sm:$0xff]
    %v32 = vld [vmem:[%s1 + $0x40] sm:$0xff]
    %v33 = vld [vmem:[%s1 + $0x48] sm:$0xff]
    %v34 = vld [vmem:[%s1 + $0x50] sm:$0xff]
    %v35 = vld [vmem:[%s1 + $0x58] sm:$0xff]
    %v36 = vld [vmem:[%s1 + $0x60] sm:$0xff]
    %v37 = vld [vmem:[%s1 + $0x68] sm:$0xff]
    %v38 = vld [vmem:[%s1 + $0x70] sm:$0xff]
    %v39 = vld [vmem:[%s1 + $0x78] sm:$0xff]
    %v40 = vld [vmem:[%s1 + $0x80] sm:$0xff]
    %v41 = vld [vmem:[%s1 + $0x88] sm:$0xff]
    %v42 = vld [vmem:[%s1 + $0x90] sm:$0xff]
    %v43 = vld [vmem:[%s1 + $0x98] sm:$0xff]
    %v44 = vld [vmem:[%s1 + $0xa0] sm:$0xff]
    %v45 = vld [vmem:[%s1 + $0xa8] sm:$0xff]
    %v46 = vld [vmem:[%s1 + $0xb0] sm:$0xff]
    %v47 = vld [vmem:[%s1 + $0xb8] sm:$0xff]
    %v48 = vld [vmem:[%s1 + $0xc0] sm:$0xff]
    %v49 = vld [vmem:[%s1 + $0xc8] sm:$0xff]
    %v50 = vld [vmem:[%s1 + $0xd0] sm:$0xff]
    %v51 = vld [vmem:[%s1 + $0xd8] sm:$0xff]
    %v52 = vld [vmem:[%s1 + $0xe0] sm:$0xff]
    %v53 = vld [vmem:[%s1 + $0xe8] sm:$0xff]
    %v54 = vld [vmem:[%s1 + $0xf0] sm:$0xff]
    %v55 = vld [vmem:[%s1 + $0xf8] sm:$0xff]
    %v56 = vld [vmem:[%s2] sm:$0xf]
    %v58 = vlaneseq
    %v59 = vshrl.u32 %v58, 7
    %v60 = vsub.s32 0, %v59
    %v61 = vrot.slane %v56, %v60
    %v62 = vlaneseq
    %v63 = vshrl.u32 %v62, 7
    %v64 = vsub.s32 1, %v63
    %v65 = vrot.slane %v56, %v64
    %v66 = vlaneseq
    %v67 = vshrl.u32 %v66, 7
    %v68 = vsub.s32 2, %v67
    %v69 = vrot.slane %v56, %v68
    %v70 = vlaneseq
    %v71 = vshrl.u32 %v70, 7
    %v72 = vsub.s32 3, %v71
    %v73 = vrot.slane %v56, %v72
    %v110 = vunpack.c.l.b16 %v24
    %v111 = vunpack.c.h.b16 %v24
    %v112 = vunpack.c.l.b16 %v25
    %v113 = vunpack.c.h.b16 %v25
    %v114 = vunpack.c.l.b16 %v26
    %v115 = vunpack.c.h.b16 %v26
    %v116 = vunpack.c.l.b16 %v27
    %v117 = vunpack.c.h.b16 %v27
    %v118 = vunpack.c.l.b16 %v28
    %v119 = vunpack.c.h.b16 %v28
    %v120 = vunpack.c.l.b16 %v29
    %v121 = vunpack.c.h.b16 %v29
    %v122 = vunpack.c.l.b16 %v30
    %v123 = vunpack.c.h.b16 %v30
    %v124 = vunpack.c.l.b16 %v31
    %v125 = vunpack.c.h.b16 %v31
    %v126 = vunpack.c.l.b16 %v32
    %v127 = vunpack.c.h.b16 %v32
    %v128 = vunpack.c.l.b16 %v33
    %v129 = vunpack.c.h.b16 %v33
    %v130 = vunpack.c.l.b16 %v34
    %v131 = vunpack.c.h.b16 %v34
    %v132 = vunpack.c.l.b16 %v35
    %v133 = vunpack.c.h.b16 %v35
    %v134 = vunpack.c.l.b16 %v36
    %v135 = vunpack.c.h.b16 %v36
    %v136 = vunpack.c.l.b16 %v37
    %v137 = vunpack.c.h.b16 %v37
    %v138 = vunpack.c.l.b16 %v38
    %v139 = vunpack.c.h.b16 %v38
    %v140 = vunpack.c.l.b16 %v39
    %v141 = vunpack.c.h.b16 %v39
    %v142 = vunpack.c.l.b16 %v40
    %v143 = vunpack.c.h.b16 %v40
    %v144 = vunpack.c.l.b16 %v41
    %v145 = vunpack.c.h.b16 %v41
    %v146 = vunpack.c.l.b16 %v42
    %v147 = vunpack.c.h.b16 %v42
    %v148 = vunpack.c.l.b16 %v43
    %v149 = vunpack.c.h.b16 %v43
    %v150 = vunpack.c.l.b16 %v44
    %v151 = vunpack.c.h.b16 %v44
    %v152 = vunpack.c.l.b16 %v45
    %v153 = vunpack.c.h.b16 %v45
    %v154 = vunpack.c.l.b16 %v46
    %v155 = vunpack.c.h.b16 %v46
    %v156 = vunpack.c.l.b16 %v47
    %v157 = vunpack.c.h.b16 %v47
    %v158 = vunpack.c.l.b16 %v48
    %v159 = vunpack.c.h.b16 %v48
    %v160 = vunpack.c.l.b16 %v49
    %v161 = vunpack.c.h.b16 %v49
    %v162 = vunpack.c.l.b16 %v50
    %v163 = vunpack.c.h.b16 %v50
    %v164 = vunpack.c.l.b16 %v51
    %v165 = vunpack.c.h.b16 %v51
    %v166 = vunpack.c.l.b16 %v52
    %v167 = vunpack.c.h.b16 %v52
    %v168 = vunpack.c.l.b16 %v53
    %v169 = vunpack.c.h.b16 %v53
    %v170 = vunpack.c.l.b16 %v54
    %v171 = vunpack.c.h.b16 %v54
    %v172 = vunpack.c.l.b16 %v55
    %v173 = vunpack.c.h.b16 %v55
    %v174 = vpack.c.b16 %v114, %v110
    %v175 = vpack.c.b16 %v115, %v111
    %v176 = vpack.c.b16 %v116, %v112
    %v177 = vpack.c.b16 %v117, %v113
    %v178 = vpack.c.b16 %v122, %v118
    %v179 = vpack.c.b16 %v123, %v119
    %v180 = vpack.c.b16 %v124, %v120
    %v181 = vpack.c.b16 %v125, %v121
    %v182 = vpack.c.b16 %v130, %v126
    %v183 = vpack.c.b16 %v131, %v127
    %v184 = vpack.c.b16 %v132, %v128
    %v185 = vpack.c.b16 %v133, %v129
    %v186 = vpack.c.b16 %v138, %v134
    %v187 = vpack.c.b16 %v139, %v135
    %v188 = vpack.c.b16 %v140, %v136
    %v189 = vpack.c.b16 %v141, %v137
    %v190 = vpack.c.b16 %v146, %v142
    %v191 = vpack.c.b16 %v147, %v143
    %v192 = vpack.c.b16 %v148, %v144
    %v193 = vpack.c.b16 %v149, %v145
    %v194 = vpack.c.b16 %v154, %v150
    %v195 = vpack.c.b16 %v155, %v151
    %v196 = vpack.c.b16 %v156, %v152
    %v197 = vpack.c.b16 %v157, %v153
    %v198 = vpack.c.b16 %v162, %v158
    %v199 = vpack.c.b16 %v163, %v159
    %v200 = vpack.c.b16 %v164, %v160
    %v201 = vpack.c.b16 %v165, %v161
    %v202 = vpack.c.b16 %v170, %v166
    %v203 = vpack.c.b16 %v171, %v167
    %v204 = vpack.c.b16 %v172, %v168
    %v205 = vpack.c.b16 %v173, %v169
    %238 = vmatprep.subr.bf16.mxu0 %v175
    %239 = vmatpush1.bf16.msra.mxu0 %v174
    %240 = vmatprep.subr.bf16.mxu0 %v179
    %241 = vmatpush1.bf16.msra.mxu0 %v178
    %242 = vmatprep.subr.bf16.mxu0 %v183
    %243 = vmatpush1.bf16.msra.mxu0 %v182
    %244 = vmatprep.subr.bf16.mxu0 %v187
    %245 = vmatpush1.bf16.msra.mxu0 %v186
    %246 = vmatprep.subr.bf16.mxu0 %v191
    %247 = vmatpush1.bf16.msra.mxu0 %v190
    %248 = vmatprep.subr.bf16.mxu0 %v195
    %249 = vmatpush1.bf16.msra.mxu0 %v194
    %250 = vmatprep.subr.bf16.mxu0 %v199
    %251 = vmatpush1.bf16.msra.mxu0 %v198
    %252 = vmatprep.subr.bf16.mxu0 %v203
    %253 = vmatpush1.bf16.msra.mxu0 %v202
    %254 = vmatprep.subr.bf16.mxu0 0
    %255 = vmatpush1.bf16.msra.mxu0 0
    %256 = vmatprep.subr.bf16.mxu0 0
    %257 = vmatpush1.bf16.msra.mxu0 0
    %258 = vmatprep.subr.bf16.mxu0 0
    %259 = vmatpush1.bf16.msra.mxu0 0
    %260 = vmatprep.subr.bf16.mxu0 0
    %261 = vmatpush1.bf16.msra.mxu0 0
    %262 = vmatprep.subr.bf16.mxu0 0
    %263 = vmatpush1.bf16.msra.mxu0 0
    %264 = vmatprep.subr.bf16.mxu0 0
    %265 = vmatpush1.bf16.msra.mxu0 0
    %266 = vmatprep.subr.bf16.mxu0 0
    %267 = vmatpush1.bf16.msra.mxu0 0
    %268 = vmatprep.subr.bf16.mxu0 0
    %269 = vmatpush1.bf16.msra.mxu0 0
    %270 = vmatprep.mubr.bf16.mxu0 0
    %271 = vmatmul.mubr.bf16.gmra.mrb[0].mxu0 %v23
    %v272 = vpop.f32.mrb[0].mxu0
    %v273 = vadd.f32 %v61, %v272
    %v274 = vpop.f32.mrb[0].mxu0
    %v275 = vadd.f32 %v65, %v274
    %v276 = vpop.f32.mrb[0].mxu0
    %v277 = vpop.f32.mrb[0].mxu0
    %278 = vdwg.mxu0
    %279 = vmatprep.subr.bf16.mxu0 %v177
    %280 = vmatpush1.bf16.msra.mxu0 %v176
    %281 = vmatprep.subr.bf16.mxu0 %v181
    %282 = vmatpush1.bf16.msra.mxu0 %v180
    %283 = vmatprep.subr.bf16.mxu0 %v185
    %284 = vmatpush1.bf16.msra.mxu0 %v184
    %285 = vmatprep.subr.bf16.mxu0 %v189
    %286 = vmatpush1.bf16.msra.mxu0 %v188
    %287 = vmatprep.subr.bf16.mxu0 %v193
    %288 = vmatpush1.bf16.msra.mxu0 %v192
    %289 = vmatprep.subr.bf16.mxu0 %v197
    %290 = vmatpush1.bf16.msra.mxu0 %v196
    %291 = vmatprep.subr.bf16.mxu0 %v201
    %292 = vmatpush1.bf16.msra.mxu0 %v200
    %293 = vmatprep.subr.bf16.mxu0 %v205
    %294 = vmatpush1.bf16.msra.mxu0 %v204
    %295 = vmatprep.subr.bf16.mxu0 0
    %296 = vmatpush1.bf16.msra.mxu0 0
    %297 = vmatprep.subr.bf16.mxu0 0
    %298 = vmatpush1.bf16.msra.mxu0 0
    %299 = vmatprep.subr.bf16.mxu0 0
    %300 = vmatpush1.bf16.msra.mxu0 0
    %301 = vmatprep.subr.bf16.mxu0 0
    %302 = vmatpush1.bf16.msra.mxu0 0
    %303 = vmatprep.subr.bf16.mxu0 0
    %304 = vmatpush1.bf16.msra.mxu0 0
    %305 = vmatprep.subr.bf16.mxu0 0
    %306 = vmatpush1.bf16.msra.mxu0 0
    %307 = vmatprep.subr.bf16.mxu0 0
    %308 = vmatpush1.bf16.msra.mxu0 0
    %309 = vmatprep.subr.bf16.mxu0 0
    %310 = vmatpush1.bf16.msra.mxu0 0
    %311 = vmatprep.mubr.bf16.mxu0 0
    %312 = vmatmul.mubr.bf16.gmra.mrb[0].mxu0 %v23
    %v313 = vpop.f32.mrb[0].mxu0
    %v314 = vadd.f32 %v69, %v313
    %v315 = vpop.f32.mrb[0].mxu0
    %v316 = vadd.f32 %v73, %v315
    %v317 = vpop.f32.mrb[0].mxu0
    %v318 = vpop.f32.mrb[0].mxu0
    %319 = vdwg.mxu0
    %v320 = vmax.f32 %v273, 0.0
    %v321 = vmax.f32 %v275, 0.0
    %v322 = vmax.f32 %v314, 0.0
    %v323 = vmax.f32 %v316, 0.0
    %v324 = vpack.c.bf16 %v320, %v320
    %v325 = vpack.c.bf16 %v321, %v321
    %v326 = vpack.c.bf16 %v322, %v322
    %v327 = vpack.c.bf16 %v323, %v323
    %v328 = vld [vmem:[%s3] sm:$0xf]
    %v329 = vld [vmem:[%s3 + $0x4] sm:$0xf]
    %v330 = vld [vmem:[%s3 + $0x8] sm:$0xf]
    %v331 = vld [vmem:[%s3 + $0xc] sm:$0xf]
    %v332 = vld [vmem:[%s3 + $0x10] sm:$0xf]
    %v333 = vld [vmem:[%s3 + $0x14] sm:$0xf]
    %v334 = vld [vmem:[%s3 + $0x18] sm:$0xf]
    %v335 = vld [vmem:[%s3 + $0x1c] sm:$0xf]
    %v336 = vld [vmem:[%s3 + $0x20] sm:$0xf]
    %v337 = vld [vmem:[%s3 + $0x24] sm:$0xf]
    %v338 = vld [vmem:[%s3 + $0x28] sm:$0xf]
    %v339 = vld [vmem:[%s3 + $0x2c] sm:$0xf]
    %v340 = vld [vmem:[%s3 + $0x30] sm:$0xf]
    %v341 = vld [vmem:[%s3 + $0x34] sm:$0xf]
    %v342 = vld [vmem:[%s3 + $0x38] sm:$0xf]
    %v343 = vld [vmem:[%s3 + $0x3c] sm:$0xf]
    %v344 = vld [vmem:[%s3 + $0x40] sm:$0xf]
    %v345 = vld [vmem:[%s3 + $0x44] sm:$0xf]
    %v346 = vld [vmem:[%s3 + $0x48] sm:$0xf]
    %v347 = vld [vmem:[%s3 + $0x4c] sm:$0xf]
    %v348 = vld [vmem:[%s3 + $0x50] sm:$0xf]
    %v349 = vld [vmem:[%s3 + $0x54] sm:$0xf]
    %v350 = vld [vmem:[%s3 + $0x58] sm:$0xf]
    %v351 = vld [vmem:[%s3 + $0x5c] sm:$0xf]
    %v352 = vld [vmem:[%s3 + $0x60] sm:$0xf]
    %v353 = vld [vmem:[%s3 + $0x64] sm:$0xf]
    %v354 = vld [vmem:[%s3 + $0x68] sm:$0xf]
    %v355 = vld [vmem:[%s3 + $0x6c] sm:$0xf]
    %v356 = vld [vmem:[%s3 + $0x70] sm:$0xf]
    %v357 = vld [vmem:[%s3 + $0x74] sm:$0xf]
    %v358 = vld [vmem:[%s3 + $0x78] sm:$0xf]
    %v359 = vld [vmem:[%s3 + $0x7c] sm:$0xf]
    %v360 = vld [vmem:[%s3 + $0x80] sm:$0xf]
    %v361 = vld [vmem:[%s3 + $0x84] sm:$0xf]
    %v362 = vld [vmem:[%s3 + $0x88] sm:$0xf]
    %v363 = vld [vmem:[%s3 + $0x8c] sm:$0xf]
    %v364 = vld [vmem:[%s3 + $0x90] sm:$0xf]
    %v365 = vld [vmem:[%s3 + $0x94] sm:$0xf]
    %v366 = vld [vmem:[%s3 + $0x98] sm:$0xf]
    %v367 = vld [vmem:[%s3 + $0x9c] sm:$0xf]
    %v368 = vld [vmem:[%s3 + $0xa0] sm:$0xf]
    %v369 = vld [vmem:[%s3 + $0xa4] sm:$0xf]
    %v370 = vld [vmem:[%s3 + $0xa8] sm:$0xf]
    %v371 = vld [vmem:[%s3 + $0xac] sm:$0xf]
    %v372 = vld [vmem:[%s3 + $0xb0] sm:$0xf]
    %v373 = vld [vmem:[%s3 + $0xb4] sm:$0xf]
    %v374 = vld [vmem:[%s3 + $0xb8] sm:$0xf]
    %v375 = vld [vmem:[%s3 + $0xbc] sm:$0xf]
    %v376 = vld [vmem:[%s3 + $0xc0] sm:$0xf]
    %v377 = vld [vmem:[%s3 + $0xc4] sm:$0xf]
    %v378 = vld [vmem:[%s3 + $0xc8] sm:$0xf]
    %v379 = vld [vmem:[%s3 + $0xcc] sm:$0xf]
    %v380 = vld [vmem:[%s3 + $0xd0] sm:$0xf]
    %v381 = vld [vmem:[%s3 + $0xd4] sm:$0xf]
    %v382 = vld [vmem:[%s3 + $0xd8] sm:$0xf]
    %v383 = vld [vmem:[%s3 + $0xdc] sm:$0xf]
    %v384 = vld [vmem:[%s3 + $0xe0] sm:$0xf]
    %v385 = vld [vmem:[%s3 + $0xe4] sm:$0xf]
    %v386 = vld [vmem:[%s3 + $0xe8] sm:$0xf]
    %v387 = vld [vmem:[%s3 + $0xec] sm:$0xf]
    %v388 = vld [vmem:[%s3 + $0xf0] sm:$0xf]
    %v389 = vld [vmem:[%s3 + $0xf4] sm:$0xf]
    %v390 = vld [vmem:[%s3 + $0xf8] sm:$0xf]
    %v391 = vld [vmem:[%s3 + $0xfc] sm:$0xf]
    %v392 = vld [vmem:[%s4] sm:$0x1]
    %v394 = vlaneseq
    %v395 = vshrl.u32 %v394, 7
    %v396 = vsub.s32 0, %v395
    %v397 = vrot.slane %v392, %v396
    %v463 = vunpack.c.l.b16 %v328
    %v464 = vunpack.c.l.b16 %v329
    %v465 = vunpack.c.l.b16 %v330
    %v466 = vunpack.c.l.b16 %v331
    %v467 = vunpack.c.l.b16 %v332
    %v468 = vunpack.c.l.b16 %v333
    %v469 = vunpack.c.l.b16 %v334
    %v470 = vunpack.c.l.b16 %v335
    %v471 = vunpack.c.l.b16 %v336
    %v472 = vunpack.c.l.b16 %v337
    %v473 = vunpack.c.l.b16 %v338
    %v474 = vunpack.c.l.b16 %v339
    %v475 = vunpack.c.l.b16 %v340
    %v476 = vunpack.c.l.b16 %v341
    %v477 = vunpack.c.l.b16 %v342
    %v478 = vunpack.c.l.b16 %v343
    %v479 = vunpack.c.l.b16 %v344
    %v480 = vunpack.c.l.b16 %v345
    %v481 = vunpack.c.l.b16 %v346
    %v482 = vunpack.c.l.b16 %v347
    %v483 = vunpack.c.l.b16 %v348
    %v484 = vunpack.c.l.b16 %v349
    %v485 = vunpack.c.l.b16 %v350
    %v486 = vunpack.c.l.b16 %v351
    %v487 = vunpack.c.l.b16 %v352
    %v488 = vunpack.c.l.b16 %v353
    %v489 = vunpack.c.l.b16 %v354
    %v490 = vunpack.c.l.b16 %v355
    %v491 = vunpack.c.l.b16 %v356
    %v492 = vunpack.c.l.b16 %v357
    %v493 = vunpack.c.l.b16 %v358
    %v494 = vunpack.c.l.b16 %v359
    %v495 = vunpack.c.l.b16 %v360
    %v496 = vunpack.c.l.b16 %v361
    %v497 = vunpack.c.l.b16 %v362
    %v498 = vunpack.c.l.b16 %v363
    %v499 = vunpack.c.l.b16 %v364
    %v500 = vunpack.c.l.b16 %v365
    %v501 = vunpack.c.l.b16 %v366
    %v502 = vunpack.c.l.b16 %v367
    %v503 = vunpack.c.l.b16 %v368
    %v504 = vunpack.c.l.b16 %v369
    %v505 = vunpack.c.l.b16 %v370
    %v506 = vunpack.c.l.b16 %v371
    %v507 = vunpack.c.l.b16 %v372
    %v508 = vunpack.c.l.b16 %v373
    %v509 = vunpack.c.l.b16 %v374
    %v510 = vunpack.c.l.b16 %v375
    %v511 = vunpack.c.l.b16 %v376
    %v512 = vunpack.c.l.b16 %v377
    %v513 = vunpack.c.l.b16 %v378
    %v514 = vunpack.c.l.b16 %v379
    %v515 = vunpack.c.l.b16 %v380
    %v516 = vunpack.c.l.b16 %v381
    %v517 = vunpack.c.l.b16 %v382
    %v518 = vunpack.c.l.b16 %v383
    %v519 = vunpack.c.l.b16 %v384
    %v520 = vunpack.c.l.b16 %v385
    %v521 = vunpack.c.l.b16 %v386
    %v522 = vunpack.c.l.b16 %v387
    %v523 = vunpack.c.l.b16 %v388
    %v524 = vunpack.c.l.b16 %v389
    %v525 = vunpack.c.l.b16 %v390
    %v526 = vunpack.c.l.b16 %v391
    %v527 = vpack.c.b16 %v464, %v463
    %v528 = vpack.c.b16 %v466, %v465
    %v529 = vpack.c.b16 %v468, %v467
    %v530 = vpack.c.b16 %v470, %v469
    %v531 = vpack.c.b16 %v472, %v471
    %v532 = vpack.c.b16 %v474, %v473
    %v533 = vpack.c.b16 %v476, %v475
    %v534 = vpack.c.b16 %v478, %v477
    %v535 = vpack.c.b16 %v480, %v479
    %v536 = vpack.c.b16 %v482, %v481
    %v537 = vpack.c.b16 %v484, %v483
    %v538 = vpack.c.b16 %v486, %v485
    %v539 = vpack.c.b16 %v488, %v487
    %v540 = vpack.c.b16 %v490, %v489
    %v541 = vpack.c.b16 %v492, %v491
    %v542 = vpack.c.b16 %v494, %v493
    %v543 = vpack.c.b16 %v496, %v495
    %v544 = vpack.c.b16 %v498, %v497
    %v545 = vpack.c.b16 %v500, %v499
    %v546 = vpack.c.b16 %v502, %v501
    %v547 = vpack.c.b16 %v504, %v503
    %v548 = vpack.c.b16 %v506, %v505
    %v549 = vpack.c.b16 %v508, %v507
    %v550 = vpack.c.b16 %v510, %v509
    %v551 = vpack.c.b16 %v512, %v511
    %v552 = vpack.c.b16 %v514, %v513
    %v553 = vpack.c.b16 %v516, %v515
    %v554 = vpack.c.b16 %v518, %v517
    %v555 = vpack.c.b16 %v520, %v519
    %v556 = vpack.c.b16 %v522, %v521
    %v557 = vpack.c.b16 %v524, %v523
    %v558 = vpack.c.b16 %v526, %v525
    %591 = vmatprep.subr.bf16.mxu0 0
    %592 = vmatpush1.bf16.msra.mxu0 %v527
    %593 = vmatprep.subr.bf16.mxu0 0
    %594 = vmatpush1.bf16.msra.mxu0 %v528
    %595 = vmatprep.subr.bf16.mxu0 0
    %596 = vmatpush1.bf16.msra.mxu0 %v529
    %597 = vmatprep.subr.bf16.mxu0 0
    %598 = vmatpush1.bf16.msra.mxu0 %v530
    %599 = vmatprep.subr.bf16.mxu0 0
    %600 = vmatpush1.bf16.msra.mxu0 %v531
    %601 = vmatprep.subr.bf16.mxu0 0
    %602 = vmatpush1.bf16.msra.mxu0 %v532
    %603 = vmatprep.subr.bf16.mxu0 0
    %604 = vmatpush1.bf16.msra.mxu0 %v533
    %605 = vmatprep.subr.bf16.mxu0 0
    %606 = vmatpush1.bf16.msra.mxu0 %v534
    %607 = vmatprep.subr.bf16.mxu0 0
    %608 = vmatpush1.bf16.msra.mxu0 %v535
    %609 = vmatprep.subr.bf16.mxu0 0
    %610 = vmatpush1.bf16.msra.mxu0 %v536
    %611 = vmatprep.subr.bf16.mxu0 0
    %612 = vmatpush1.bf16.msra.mxu0 %v537
    %613 = vmatprep.subr.bf16.mxu0 0
    %614 = vmatpush1.bf16.msra.mxu0 %v538
    %615 = vmatprep.subr.bf16.mxu0 0
    %616 = vmatpush1.bf16.msra.mxu0 %v539
    %617 = vmatprep.subr.bf16.mxu0 0
    %618 = vmatpush1.bf16.msra.mxu0 %v540
    %619 = vmatprep.subr.bf16.mxu0 0
    %620 = vmatpush1.bf16.msra.mxu0 %v541
    %621 = vmatprep.subr.bf16.mxu0 0
    %622 = vmatpush1.bf16.msra.mxu0 %v542
    %623 = vmatprep.mubr.bf16.mxu0 %v325
    %624 = vmatmul.mubr.bf16.gmra.mrb[0].mxu0 %v324
    %v625 = vpop.f32.mrb[0].mxu0
    %v626 = vadd.f32 %v397, %v625
    %v627 = vpop.f32.mrb[0].mxu0
    %v628 = vpop.f32.mrb[0].mxu0
    %v629 = vpop.f32.mrb[0].mxu0
    %630 = vdwg.mxu0
    %631 = vmatprep.subr.bf16.mxu0 0
    %632 = vmatpush1.bf16.msra.mxu0 %v543
    %633 = vmatprep.subr.bf16.mxu0 0
    %634 = vmatpush1.bf16.msra.mxu0 %v544
    %635 = vmatprep.subr.bf16.mxu0 0
    %636 = vmatpush1.bf16.msra.mxu0 %v545
    %637 = vmatprep.subr.bf16.mxu0 0
    %638 = vmatpush1.bf16.msra.mxu0 %v546
    %639 = vmatprep.subr.bf16.mxu0 0
    %640 = vmatpush1.bf16.msra.mxu0 %v547
    %641 = vmatprep.subr.bf16.mxu0 0
    %642 = vmatpush1.bf16.msra.mxu0 %v548
    %643 = vmatprep.subr.bf16.mxu0 0
    %644 = vmatpush1.bf16.msra.mxu0 %v549
    %645 = vmatprep.subr.bf16.mxu0 0
    %646 = vmatpush1.bf16.msra.mxu0 %v550
    %647 = vmatprep.subr.bf16.mxu0 0
    %648 = vmatpush1.bf16.msra.mxu0 %v551
    %649 = vmatprep.subr.bf16.mxu0 0
    %650 = vmatpush1.bf16.msra.mxu0 %v552
    %651 = vmatprep.subr.bf16.mxu0 0
    %652 = vmatpush1.bf16.msra.mxu0 %v553
    %653 = vmatprep.subr.bf16.mxu0 0
    %654 = vmatpush1.bf16.msra.mxu0 %v554
    %655 = vmatprep.subr.bf16.mxu0 0
    %656 = vmatpush1.bf16.msra.mxu0 %v555
    %657 = vmatprep.subr.bf16.mxu0 0
    %658 = vmatpush1.bf16.msra.mxu0 %v556
    %659 = vmatprep.subr.bf16.mxu0 0
    %660 = vmatpush1.bf16.msra.mxu0 %v557
    %661 = vmatprep.subr.bf16.mxu0 0
    %662 = vmatpush1.bf16.msra.mxu0 %v558
    %663 = vmatprep.mubr.bf16.mxu0 %v327
    %664 = vmatmul.mubr.bf16.gmra.mrb[0].mxu0 %v326
    %v665 = vpop.f32.mrb[0].mxu0
    %v666 = vadd.f32 %v626, %v665
    %v667 = vpop.f32.mrb[0].mxu0
    %v668 = vpop.f32.mrb[0].mxu0
    %v669 = vpop.f32.mrb[0].mxu0
    %670 = vdwg.mxu0
    %671 = vst [vmem:[#allocation2] sm:$0x3] %v666
    // Predicated region
    $region22: #{moco_forward.3} parent=1 // pred_check
      _
    $region23: #{moco_forward.3} parent=1 // pred_check_branch
      %673 = sbr.rel (0) target = $region25
    $region24: #{moco_forward.3} parent=1 // pred_region
      %s675 = ssub.s32 32, 32
      %676 = vsyncadd [#allocation3], %s675
      %s678 = sshll.u32 [#allocation2], 4
      %s679 = int_to_ptr.vmem [resolvable:$true] %s678
      %681 = dma.vmem_to_hbm [thread:$0]  %s679, 32, %s5, [#allocation3]
    $region25: #{moco_forward.3} parent=1 // pred_fallthru
      _
    // Predicated region
    $region26: #{moco_forward.3} parent=1 // pred_check
      _
    $region27: #{moco_forward.3} parent=1 // pred_check_branch
      %683 = sbr.rel (0) target = $region29
    $region28: #{moco_forward.3} parent=1 // pred_region
      %684 = dma.done [#allocation3], 32
    $region29: #{moco_forward.3} parent=1 // pred_fallthru
      _
    %685 = vsyncpa [#allocation3], 1

</llo_original>
